<compile_context>
chip_gen: v5e
topology: v5e:2x2
jax: 0.10.0
libtpu: 0.0.40
codegen_flags: <defaults>
</compile_context>

<pallas_src>
import jax
import jax.numpy as jnp
from jax import lax
from jax.experimental import pallas as pl
from jax.experimental.pallas import tpu as pltpu

KH = KW = 5
PAD = 2

# Integer SRM kernel from HighPassFilter.__init__ (the /12 is applied once at
# the end of the stencil instead of per tap).
_K_INT = [[-1,  2,  -2,  2, -1],
          [ 2, -6,   8, -6,  2],
          [-2,  8, -12,  8, -2],
          [ 2, -6,   8, -6,  2],
          [-1,  2,  -2,  2, -1]]


def _make_kernel(H, W, P):
    """Builds a kernel operating on one (H, P*W) lane-packed group of slabs."""
    L = P * W               # packed lane width (P slabs of width W)
    Hp = H + 2 * PAD        # vertically padded rows
    Lp = L + 2 * PAD        # 2-lane zero columns only at the packed-slab ends

    def kernel(x_ref, o_ref, xp_ref):
        # x_ref/o_ref: (H, L)   lane-packed input/output (period W per slab)
        # xp_ref     : (Hp, Lp) f32 VMEM scratch, zero halo rebuilt every step
        # Zero the whole scratch with one wide store (kills the narrow width-2
        # column stores); VMEM scratch is never implicitly zeroed and with
        # 'parallel' sharding we cannot rely on a step-0 init.
        xp_ref[...] = jnp.zeros((Hp, Lp), jnp.float32)
        # Single full-width interior store.
        xp_ref[PAD:PAD + H, PAD:PAD + L] = x_ref[...].astype(jnp.float32)

        # 5 lane-shifted operands, read as scratch-ref slices.
        c0 = xp_ref[:, 0:L]
        c1 = xp_ref[:, 1:1 + L]
        c2 = xp_ref[:, 2:2 + L]
        c3 = xp_ref[:, 3:3 + L]
        c4 = xp_ref[:, 4:4 + L]

        if P > 1:
            # Mask out contributions that leaked across packed-slab boundaries
            # (period W along the lane axis). The 2-lane end columns of the
            # scratch already cover the outermost boundaries.
            lane = lax.broadcasted_iota(jnp.int32, (Hp, L), 1)
            lmod = lane % W
            c0 = jnp.where(lmod >= 2, c0, 0.0)
            c1 = jnp.where(lmod >= 1, c1, 0.0)
            c3 = jnp.where(lmod <= W - 2, c3, 0.0)
            c4 = jnp.where(lmod <= W - 3, c4, 0.0)

        # Column symmetry within each kernel row: w[.,0]==w[.,4], w[.,1]==w[.,3]
        s04 = c0 + c4
        s13 = c1 + c3
        # Rank-2 separable decomposition of the integer SRM kernel.
        ha = 2.0 * s13 - s04 - 2.0 * c2            # a = [-1,  2, -2,  2, -1]
        hb = 2.0 * s04 - 6.0 * s13 + 8.0 * c2      # b = [ 2, -6,  8, -6,  2]
        yp = ha[0:H] - 2.0 * ha[2:2 + H] + ha[4:4 + H]      # p = [1, 0, -2, 0, 1]
        yq = hb[1:1 + H] - 2.0 * hb[2:2 + H] + hb[3:3 + H]  # q = [0, 1, -2, 1, 0]
        o_ref[...] = ((yp + yq) * (1.0 / 12.0)).astype(o_ref.dtype)

    return kernel


def _choose_pack(NC, H, W, itemsize, vmem_compute_budget=24 * 1024 * 1024):
    """Pick P = slabs packed per grid step (lane density vs. grid granularity)."""
    p_cap = max(1, 128 // W)  # pack up to ~128 lanes; no-op when W >= 128

    def footprint(P):
        L = P * W
        return (2 * 2 * H * L * itemsize        # double-buffered in + out
                + (H + 4) * (L + 4) * 4         # padded f32 scratch
                + 8 * (H + 4) * L * 4)          # slab temporaries margin

    while p_cap > 1 and footprint(p_cap) > vmem_compute_budget:
        p_cap -= 1

    # Largest divisor of NC that fits the lane/VMEM caps while keeping the
    # grid >= 2 steps (pipelining + v7x megacore sharding).
    best = 1
    for P in range(1, min(p_cap, NC) + 1):
        if NC % P == 0 and (NC // P >= 2 or NC == 1):
            best = P
    return best


def high_pass_filter(x):
    """x: (N, 3, H, W) -> (N, 3, H, W); matches
    nn.Conv2d(3, 3, 5, padding=2, bias=False, groups=3) with the fixed SRM kernel."""
    N, C, H, W = x.shape
    NC = N * C
    itemsize = jnp.dtype(x.dtype).itemsize

    P = _choose_pack(NC, H, W, itemsize)
    G = NC // P
    L = P * W
    Hp, Lp = H + 2 * PAD, L + 2 * PAD

    # Layout plumbing only (no padding pass): pack P channel-slabs side by side
    # along the lane axis so VPU ops and stores are lane-dense for small W.
    xg = x.reshape(G, P, H, W).transpose(0, 2, 1, 3).reshape(G, H, L)

    # VMEM limit derived from the actual per-step footprint; 48 MiB cap keeps
    # headroom under v7x's 64 MiB physical VMEM (and is trivially safe on
    # v5e/v6e's 128 MiB).
    footprint = 2 * 2 * H * L * itemsize + Hp * Lp * 4 + 8 * Hp * L * 4
    vmem_limit = int(min(48 * 1024 * 1024, max(16 * 1024 * 1024, 2 * footprint)))

    # TODO(synk): for very large images (whole-slab footprint > budget at P=1),
    # strip-mine H with a 4-row halo instead of whole-slab temporaries.
    out = pl.pallas_call(
        _make_kernel(H, W, P),
        out_shape=jax.ShapeDtypeStruct((G, H, L), x.dtype),
        grid_spec=pltpu.PrefetchScalarGridSpec(
            num_scalar_prefetch=0,
            grid=(G,),
            in_specs=[pl.BlockSpec((None, H, L), lambda g: (g, 0, 0))],
            out_specs=pl.BlockSpec((None, H, L), lambda g: (g, 0, 0)),
            scratch_shapes=[pltpu.VMEM((Hp, Lp), jnp.float32)],
        ),
        compiler_params=pltpu.CompilerParams(
            dimension_semantics=("parallel",),
            vmem_limit_bytes=vmem_limit,
        ),
    )(xg)

    return out.reshape(G, H, P, W).transpose(0, 2, 1, 3).reshape(N, C, H, W)


if __name__ == "__main__":
    key = jax.random.PRNGKey(0)
    N, C, H, W = 2, 3, 16, 16  # module is fixed to 3 channels (groups=3)
    x = jax.random.normal(key, (N, C, H, W), dtype=jnp.float32)

    out = jax.block_until_ready(high_pass_filter(x))

    # Reference: depthwise conv identical to the PyTorch module.
    w = (jnp.asarray(_K_INT, dtype=jnp.float32) / 12.0).reshape(1, 1, KH, KW)
    w = jnp.tile(w, (C, 1, 1, 1))  # == kernel.repeat(3, 1, 1, 1)
    ref = lax.conv_general_dilated(
        x, w, window_strides=(1, 1), padding=((PAD, PAD), (PAD, PAD)),
        feature_group_count=C,
        dimension_numbers=("NCHW", "OIHW", "NCHW"))

    assert out.shape == (N, C, H, W)
    err = float(jnp.max(jnp.abs(out - ref)))
    assert err < 1e-4, f"mismatch vs reference conv: {err}"
    print("KERNEL_OK")
</pallas_src>

<mosaic_0001>
module attributes {stable_mosaic.version = 11 : i64} {
  func.func @kernel(%arg0: i32, %arg1: memref<1x16x48xf32, #tpu.memory_space<vmem>>, %arg2: memref<1x16x48xf32, #tpu.memory_space<vmem>>, %arg3: memref<20x52xf32, #tpu.memory_space<vmem>>) attributes {dimension_semantics = [#tpu.dimension_semantics<parallel>], iteration_bounds = array<i64: 2>, scalar_prefetch = 0 : i64, scratch_operands = 1 : i64, tpu.core_type = #tpu.core_type<tc>, window_params = [{transform_indices = @transform_0, window_bounds = array<i64: 1, 16, 48>}, {transform_indices = @transform_1, window_bounds = array<i64: 1, 16, 48>}]} {
    %cst = arith.constant 0.000000e+00 : f32
    %0 = vector.broadcast %cst : f32 to vector<20x52xf32>
    %c0 = arith.constant 0 : index
    %c0_0 = arith.constant 0 : index
    %1 = vector.load %arg3[%c0, %c0_0] : memref<20x52xf32, #tpu.memory_space<vmem>>, vector<20x52xf32>
    tpu.vector_store %arg3[%c0, %c0_0], %0 {strides = array<i32>} : memref<20x52xf32, #tpu.memory_space<vmem>>, vector<20x52xf32>,
    %c0_1 = arith.constant 0 : index
    %c0_2 = arith.constant 0 : index
    %c0_3 = arith.constant 0 : index
    %2 = vector.load %arg1[%c0_1, %c0_2, %c0_3] : memref<1x16x48xf32, #tpu.memory_space<vmem>>, vector<1x16x48xf32>
    %3 = vector.shape_cast %2 : vector<1x16x48xf32> to vector<16x48xf32>
    %c2 = arith.constant 2 : index
    %c2_4 = arith.constant 2 : index
    %4 = vector.load %arg3[%c2, %c2_4] : memref<20x52xf32, #tpu.memory_space<vmem>>, vector<16x48xf32>
    tpu.vector_store %arg3[%c2, %c2_4], %3 {strides = array<i32>} : memref<20x52xf32, #tpu.memory_space<vmem>>, vector<16x48xf32>,
    %c0_5 = arith.constant 0 : index
    %c0_6 = arith.constant 0 : index
    %5 = vector.load %arg3[%c0_5, %c0_6] : memref<20x52xf32, #tpu.memory_space<vmem>>, vector<20x48xf32>
    %c0_7 = arith.constant 0 : index
    %c1 = arith.constant 1 : index
    %6 = vector.load %arg3[%c0_7, %c1] : memref<20x52xf32, #tpu.memory_space<vmem>>, vector<20x48xf32>
    %c0_8 = arith.constant 0 : index
    %c2_9 = arith.constant 2 : index
    %7 = vector.load %arg3[%c0_8, %c2_9] : memref<20x52xf32, #tpu.memory_space<vmem>>, vector<20x48xf32>
    %c0_10 = arith.constant 0 : index
    %c3 = arith.constant 3 : index
    %8 = vector.load %arg3[%c0_10, %c3] : memref<20x52xf32, #tpu.memory_space<vmem>>, vector<20x48xf32>
    %c0_11 = arith.constant 0 : index
    %c4 = arith.constant 4 : index
    %9 = vector.load %arg3[%c0_11, %c4] : memref<20x52xf32, #tpu.memory_space<vmem>>, vector<20x48xf32>
    %10 = tpu.iota {dimensions = array<i32: 1>} : vector<20x48xi32>
    %c16_i32 = arith.constant 16 : i32
    %c0_i32 = arith.constant 0 : i32
    %11 = arith.cmpi eq, %c16_i32, %c0_i32 : i32
    %c1_i32 = arith.constant 1 : i32
    %12 = arith.select %11, %c1_i32, %c16_i32 : i32
    %13 = vector.broadcast %12 : i32 to vector<20x48xi32>
    %14 = arith.remsi %10, %13 : vector<20x48xi32>
    %c0_i32_12 = arith.constant 0 : i32
    %15 = vector.broadcast %c0_i32_12 : i32 to vector<20x48xi32>
    %16 = arith.cmpi ne, %14, %15 : vector<20x48xi32>
    %c0_i32_13 = arith.constant 0 : i32
    %17 = vector.broadcast %c0_i32_13 : i32 to vector<20x48xi32>
    %18 = arith.cmpi slt, %14, %17 : vector<20x48xi32>
    %c0_i32_14 = arith.constant 0 : i32
    %19 = arith.cmpi slt, %12, %c0_i32_14 : i32
    %20 = vector.broadcast %19 : i1 to vector<20x48xi1>
    %21 = vector.broadcast %20 : vector<20x48xi1> to vector<20x48xi1>
    %22 = arith.xori %18, %21 : vector<20x48xi1>
    %23 = arith.andi %22, %16 : vector<20x48xi1>
    %24 = vector.broadcast %12 : i32 to vector<20x48xi32>
    %25 = arith.addi %14, %24 : vector<20x48xi32>
    %26 = arith.select %23, %25, %14 : vector<20x48xi1>, vector<20x48xi32>
    %c2_i32 = arith.constant 2 : i32
    %27 = vector.broadcast %c2_i32 : i32 to vector<20x48xi32>
    %28 = arith.cmpi sge, %26, %27 : vector<20x48xi32>
    %cst_15 = arith.constant 0.000000e+00 : f32
    %29 = vector.broadcast %cst_15 : f32 to vector<20x48xf32>
    %30 = arith.select %28, %5, %29 : vector<20x48xi1>, vector<20x48xf32>
    %c1_i32_16 = arith.constant 1 : i32
    %31 = vector.broadcast %c1_i32_16 : i32 to vector<20x48xi32>
    %32 = arith.cmpi sge, %26, %31 : vector<20x48xi32>
    %cst_17 = arith.constant 0.000000e+00 : f32
    %33 = vector.broadcast %cst_17 : f32 to vector<20x48xf32>
    %34 = arith.select %32, %6, %33 : vector<20x48xi1>, vector<20x48xf32>
    %c14_i32 = arith.constant 14 : i32
    %35 = vector.broadcast %c14_i32 : i32 to vector<20x48xi32>
    %36 = arith.cmpi sle, %26, %35 : vector<20x48xi32>
    %cst_18 = arith.constant 0.000000e+00 : f32
    %37 = vector.broadcast %cst_18 : f32 to vector<20x48xf32>
    %38 = arith.select %36, %8, %37 : vector<20x48xi1>, vector<20x48xf32>
    %c13_i32 = arith.constant 13 : i32
    %39 = vector.broadcast %c13_i32 : i32 to vector<20x48xi32>
    %40 = arith.cmpi sle, %26, %39 : vector<20x48xi32>
    %cst_19 = arith.constant 0.000000e+00 : f32
    %41 = vector.broadcast %cst_19 : f32 to vector<20x48xf32>
    %42 = arith.select %40, %9, %41 : vector<20x48xi1>, vector<20x48xf32>
    %43 = arith.addf %30, %42 : vector<20x48xf32>
    %44 = arith.addf %34, %38 : vector<20x48xf32>
    %cst_20 = arith.constant 2.000000e+00 : f32
    %45 = vector.broadcast %cst_20 : f32 to vector<20x48xf32>
    %46 = arith.mulf %45, %44 : vector<20x48xf32>
    %47 = arith.subf %46, %43 : vector<20x48xf32>
    %cst_21 = arith.constant 2.000000e+00 : f32
    %48 = vector.broadcast %cst_21 : f32 to vector<20x48xf32>
    %49 = arith.mulf %48, %7 : vector<20x48xf32>
    %50 = arith.subf %47, %49 : vector<20x48xf32>
    %cst_22 = arith.constant 2.000000e+00 : f32
    %51 = vector.broadcast %cst_22 : f32 to vector<20x48xf32>
    %52 = arith.mulf %51, %43 : vector<20x48xf32>
    %cst_23 = arith.constant 6.000000e+00 : f32
    %53 = vector.broadcast %cst_23 : f32 to vector<20x48xf32>
    %54 = arith.mulf %53, %44 : vector<20x48xf32>
    %55 = arith.subf %52, %54 : vector<20x48xf32>
    %cst_24 = arith.constant 8.000000e+00 : f32
    %56 = vector.broadcast %cst_24 : f32 to vector<20x48xf32>
    %57 = arith.mulf %56, %7 : vector<20x48xf32>
    %58 = arith.addf %55, %57 : vector<20x48xf32>
    %59 = vector.extract_strided_slice %50 {offsets = [0, 0], sizes = [16, 48], strides = [1, 1]} : vector<20x48xf32> to vector<16x48xf32>
    %60 = vector.extract_strided_slice %50 {offsets = [2, 0], sizes = [16, 48], strides = [1, 1]} : vector<20x48xf32> to vector<16x48xf32>
    %cst_25 = arith.constant 2.000000e+00 : f32
    %61 = vector.broadcast %cst_25 : f32 to vector<16x48xf32>
    %62 = arith.mulf %61, %60 : vector<16x48xf32>
    %63 = arith.subf %59, %62 : vector<16x48xf32>
    %64 = vector.extract_strided_slice %50 {offsets = [4, 0], sizes = [16, 48], strides = [1, 1]} : vector<20x48xf32> to vector<16x48xf32>
    %65 = arith.addf %63, %64 : vector<16x48xf32>
    %66 = vector.extract_strided_slice %58 {offsets = [1, 0], sizes = [16, 48], strides = [1, 1]} : vector<20x48xf32> to vector<16x48xf32>
    %67 = vector.extract_strided_slice %58 {offsets = [2, 0], sizes = [16, 48], strides = [1, 1]} : vector<20x48xf32> to vector<16x48xf32>
    %cst_26 = arith.constant 2.000000e+00 : f32
    %68 = vector.broadcast %cst_26 : f32 to vector<16x48xf32>
    %69 = arith.mulf %68, %67 : vector<16x48xf32>
    %70 = arith.subf %66, %69 : vector<16x48xf32>
    %71 = vector.extract_strided_slice %58 {offsets = [3, 0], sizes = [16, 48], strides = [1, 1]} : vector<20x48xf32> to vector<16x48xf32>
    %72 = arith.addf %70, %71 : vector<16x48xf32>
    %73 = arith.addf %65, %72 : vector<16x48xf32>
    %cst_27 = arith.constant 0.0833333358 : f32
    %74 = vector.broadcast %cst_27 : f32 to vector<16x48xf32>
    %75 = arith.mulf %73, %74 : vector<16x48xf32>
    %c0_28 = arith.constant 0 : index
    %c0_29 = arith.constant 0 : index
    %c0_30 = arith.constant 0 : index
    %76 = vector.load %arg2[%c0_28, %c0_29, %c0_30] : memref<1x16x48xf32, #tpu.memory_space<vmem>>, vector<1x16x48xf32>
    %77 = vector.shape_cast %76 : vector<1x16x48xf32> to vector<16x48xf32>
    %78 = vector.shape_cast %75 : vector<16x48xf32> to vector<1x16x48xf32>
    tpu.vector_store %arg2[%c0_28, %c0_29, %c0_30], %78 {strides = array<i32>} : memref<1x16x48xf32, #tpu.memory_space<vmem>>, vector<1x16x48xf32>,
    return
  }
  func.func @transform_0(%arg0: i32) -> (i32, i32, i32) {
    %c0_i32 = arith.constant 0 : i32
    %c0_i32_0 = arith.constant 0 : i32
    %c0_i32_1 = arith.constant 0 : i32
    return %arg0, %c0_i32, %c0_i32_0 : i32, i32, i32
  }
  func.func @transform_1(%arg0: i32) -> (i32, i32, i32) {
    %c0_i32 = arith.constant 0 : i32
    %c0_i32_0 = arith.constant 0 : i32
    %c0_i32_1 = arith.constant 0 : i32
    return %arg0, %c0_i32, %c0_i32_0 : i32, i32, i32
  }
}

</mosaic_0001>

<llo_original>
// kernel: tpu_custom_call.1
$region0: #{tpu_custom_call.1}
  #allocation0 [shape = 'u32[]', space=smem, size = 0x4, offset = 0x4, fixed_abs, tag = 'smem constant byte address 0x4 - core index']
  #allocation1 [shape = 'u32[72,128]{1,0:T(1,128)}', space=vmem, size = 0x9000, scoped, tag = 'internal scratch']
  #allocation2 [shape = 'f32[20,52]{1,0:T(8,128)}', space=vmem, size = 0x3000, scoped, tag = 'scratch operand']
  %s0 = inlined_call_operand.hbm [shape: f32[2,16,48], index: 0, kind: input, shape index: {}]
  %s1 = inlined_call_operand.hbm [shape: f32[2,16,48], index: 1, kind: output, shape index: {}]
  %s2 = sld [smem:[#allocation0]]
  $region41: #{tpu_custom_call.1} parent=0
    _
  %s4 = ssub.s32 1, %s2
  %s5 = scalar_select 0, %s4, %s2
  $region1: #{tpu_custom_call.1} parent=0
    #allocation3 [shape = 'u8[16384]{0}', space=vmem, size = 0x4000, scoped, tag = 'input window, operand 0']
    #allocation4 [shape = 's32[2]{0}', space=sflag, size = 0x8, scoped, tag = 'scoped memory for tpu_custom_call.1']
    #allocation5 [shape = 's32[2]{0}', space=sflag, size = 0x8, scoped, tag = 'scoped memory for tpu_custom_call.1']
    #allocation6 [shape = 'u8[16384]{0}', space=vmem, size = 0x4000, scoped, tag = 'output window, operand 0']
    %6 = vsyncpa [#allocation4], 0
    %s7 = scalar_lea.sflag [#allocation4], 1
    %8 = vsyncpa %s7, 0
    %9 = vsyncpa [#allocation5], 0
    %s10 = scalar_lea.sflag [#allocation5], 1
    %11 = vsyncpa %s10, 0
    loop: start=0, step=1, limit=4
    $region2: #{tpu_custom_call.1} parent=1 // loop_pre_header
      _
    $region3: #{tpu_custom_call.1} parent=1 // loop_header
      %s13 = sphi 0, %s17
      %p14 = scmp.ge.s32.totalorder %s13, 4
      %s23 = sphi 0, %s25
      %s26 = sphi 0, %s23
      %s27 = sphi 0, %s26
      %s43 = sphi 0, %s27
      %s49 = sphi 0, %s51
      %s52 = sphi 0, %s49
      %s53 = sphi 0, %s52
      %s69 = sphi 0, %s53
    $region4: #{tpu_custom_call.1} parent=1 // loop_header_branch
      %16 = sbr.rel (%p14) target = $region8
    $region5: #{tpu_custom_call.1} parent=1 // loop_body
      %s18 = ssub.s32 %s13, 1
      %s19 = ssub.s32 %s13, 2
      %s20 = sadd.s32 %s13, 1
      %s21 = ssub.s32 %s13, %s20
      %p22 = scmp.eq.s32.totalorder %s21, 0
      %s24 = sadd.s32 %s23, 1
      %s25 = scalar_select %p22, %s23, %s24
      %p28 = pneg %p22
      %p29 = scmp.eq.s32.totalorder %s13, 1
      %p30 = por %p28, %p29
      %p31 = scmp.ne.s32.totalorder %s23, %s26
      %p32 = scmp.eq.s32.totalorder %s13, 0
      %p33 = por %p31, %p32
      %p34 = scmp.ne.s32.totalorder %s23, %s26
      %p35 = scmp.eq.s32.totalorder %s18, 1
      %p36 = por %p34, %p35
      %p37 = scmp.ne.s32.totalorder %s26, %s27
      %p38 = scmp.eq.s32.totalorder %s18, 0
      %p39 = por %p37, %p38
      %p40 = scmp.ne.s32.totalorder %s26, %s27
      %p41 = scmp.eq.s32.totalorder %s19, 1
      %p42 = por %p40, %p41
      %p44 = scmp.ne.s32.totalorder %s27, %s43
      %p45 = scmp.eq.s32.totalorder %s19, 0
      %p46 = por %p44, %p45
      %s47 = ssub.s32 %s13, %s20
      %p48 = scmp.eq.s32.totalorder %s47, 0
      %s50 = sadd.s32 %s49, 1
      %s51 = scalar_select %p48, %s49, %s50
      %p54 = pneg %p48
      %p55 = scmp.eq.s32.totalorder %s13, 1
      %p56 = por %p54, %p55
      %p57 = scmp.ne.s32.totalorder %s49, %s52
      %p58 = scmp.eq.s32.totalorder %s13, 0
      %p59 = por %p57, %p58
      %p60 = scmp.ne.s32.totalorder %s49, %s52
      %p61 = scmp.eq.s32.totalorder %s18, 1
      %p62 = por %p60, %p61
      %p63 = scmp.ne.s32.totalorder %s52, %s53
      %p64 = scmp.eq.s32.totalorder %s18, 0
      %p65 = por %p63, %p64
      %p66 = scmp.ne.s32.totalorder %s52, %s53
      %p67 = scmp.eq.s32.totalorder %s19, 1
      %p68 = por %p66, %p67
      %p70 = scmp.ne.s32.totalorder %s53, %s69
      %p71 = scmp.eq.s32.totalorder %s19, 0
      %p72 = por %p70, %p71
      %p73 = scmp.le.s32.totalorder 1, %s13
      %p74 = scmp.lt.s32.totalorder %s13, 3
      %p75 = pnand %p73, %p74
      %p76 = pneg %p75
      // Predicated region
      $region9: #{tpu_custom_call.1} parent=5 // pred_check
        _
      $region10: #{tpu_custom_call.1} parent=5 // pred_check_branch
        %78 = sbr.rel (%p75) target = $region12
      $region11: #{tpu_custom_call.1} parent=5 // pred_region
        %s79 = ssub.s32 %s13, 1
      $region12: #{tpu_custom_call.1} parent=5 // pred_fallthru
        _
      %p80 = scmp.lt.s32.totalorder %s13, 2
      // Predicated region
      $region13: #{tpu_custom_call.1} parent=5 // pred_check
        %p81 = pneg %p80
      $region14: #{tpu_custom_call.1} parent=5 // pred_check_branch
        %83 = sbr.rel (%p81) target = $region16
      $region15: #{tpu_custom_call.1} parent=5 // pred_region
        // Predicated region
        $region17: #{tpu_custom_call.1} parent=15 // pred_check
          %p84 = pneg %p33
        $region18: #{tpu_custom_call.1} parent=15 // pred_check_branch
          %86 = sbr.rel (%p84) target = $region20
        $region19: #{tpu_custom_call.1} parent=15 // pred_region
          %s87 = sand.u32 %s23, 1
          %s88 = scalar_lea.sflag [#allocation4], %s87
          %s89 = sand.u32 %s23, 1
          %s90 = smul.addr %s89, 16
          %s91 = scalar_lea.vmem [#allocation3], %s90
          %93 = vsyncadd %s88, 0
          %s94 = smul.addr %s13, 2
          %s95 = smul.addr %s94, 8
          %s96 = scalar_lea.hbm %s0, %s95
          %s97 = sshll.u32 %s96, 4
          %s98 = int_to_ptr.hbm [resolvable:$true] %s97
          %s99 = sshll.u32 %s91, 4
          %s100 = int_to_ptr.vmem [resolvable:$true] %s99
          %105 = dma.hbm_to_vmem [thread:$0]  %s98, 256, %s100, %s88, 128, 128, 8
        $region20: #{tpu_custom_call.1} parent=15 // pred_fallthru
          _
      $region16: #{tpu_custom_call.1} parent=5 // pred_fallthru
        _
      %p106 = scmp.le.s32.totalorder 1, %s13
      %p107 = scmp.lt.s32.totalorder %s13, 3
      %p108 = pnand %p106, %p107
      %p109 = pneg %p108
      // Predicated region
      $region21: #{tpu_custom_call.1} parent=5 // pred_check
        _
      $region22: #{tpu_custom_call.1} parent=5 // pred_check_branch
        %111 = sbr.rel (%p108) target = $region24
      $region23: #{tpu_custom_call.1} parent=5 // pred_region
        %s112 = ssub.s32 %s13, 1
        %s113 = sand.u32 %s26, 1
        %s114 = scalar_lea.sflag [#allocation4], %s113
        %s115 = sand.u32 %s26, 1
        %s116 = smul.addr %s115, 16
        %s117 = scalar_lea.vmem [#allocation3], %s116
        // Predicated region
        $region25: #{tpu_custom_call.1} parent=23 // pred_check
          %p118 = pneg %p39
        $region26: #{tpu_custom_call.1} parent=23 // pred_check_branch
          %120 = sbr.rel (%p118) target = $region28
        $region27: #{tpu_custom_call.1} parent=23 // pred_region
          %122 = dma.done %s114, 256
        $region28: #{tpu_custom_call.1} parent=23 // pred_fallthru
          _
        %s123 = sand.u32 %s26, 1
        %s124 = scalar_lea.sflag [#allocation4], %s123
        %s125 = sand.u32 %s26, 1
        %s126 = smul.addr %s125, 16
        %s127 = scalar_lea.vmem [#allocation3], %s126
        %p128 = pneg %p39
        %p129 = pneg %p36
        %p130 = pneg %p65
        %p131 = pneg %p62
        %s132 = sand.u32 %s52, 1
        %s133 = scalar_lea.sflag [#allocation5], %s132
        %s134 = sand.u32 %s52, 1
        %s135 = smul.addr %s134, 16
        %s136 = scalar_lea.vmem [#allocation6], %s135
        %vm137 = vcmask 424960
        %138 = vst.msk [vmem:[#allocation2] sm:$0xff] %vm137, 0.0
        %139 = vst.msk [vmem:[#allocation2 + $0x8] sm:$0xff] %vm137, 0.0
        %vm140 = vcmask 420864
        %141 = vst.msk [vmem:[#allocation2 + $0x10] sm:$0xf] %vm140, 0.0
        %v142 = vld [vmem:[%s117] sm:$0xff]
        %v143 = vld [vmem:[%s117 + $0x8] sm:$0xff]
        %146 = vrot.lane.b32.xlu0 %v142, 2
        %v147 = vpop.permute.xlu0 %146
        %148 = vrot.lane.b32.xlu0 %v143, 2
        %v149 = vpop.permute.xlu0 %148
        %vm152 = vcmask 408592
        %153 = vst.msk [vmem:[#allocation2 + $0x2] sm:$0xff] %vm152, %v147
        %154 = vst.msk [vmem:[#allocation2 + $0xa] sm:$0xff] %vm152, %v149
        %v155 = vld [vmem:[#allocation2] sm:$0xff]
        %v156 = vld [vmem:[#allocation2 + $0x8] sm:$0xff]
        %v157 = vld [vmem:[#allocation2 + $0x10] sm:$0xf]
        %v158 = vlaneseq
        %v159 = vand.u32 %v158, 127
        %vm160 = vcmp.lt.s32.totalorder %v159, 0
        %v161 = vsub.s32 0, %v159
        %v162 = vsel %vm160, %v161, %v159
        %v163 = vshrl.u32 %v162, 4
        %v164 = vand.u32 %v162, 15
        %v165 = vsub.s32 0, %v164
        %v166 = vsel %vm160, %v165, %v164
        %vm167 = vcmp.ne.s32.totalorder %v166, 0
        %vm168 = vcmp.lt.s32.totalorder %v166, 0
        %vm169 = vmand %vm168, %vm167
        %v170 = vadd.s32 %v166, 16
        %v171 = vsel %vm169, %v170, %v166
        %vm172 = vcmp.ge.s32.totalorder %v171, 2
        %v173 = vsel %vm172, %v155, 0.0
        %v174 = vsel %vm172, %v156, 0.0
        %v175 = vsel %vm172, %v157, 0.0
        %vm176 = vcmp.ge.s32.totalorder %v171, 1
        %180 = vrot.lane.b32.xlu0 %v155, 127
        %v181 = vpop.permute.xlu0 %180
        %182 = vrot.lane.b32.xlu0 %v156, 127
        %v183 = vpop.permute.xlu0 %182
        %184 = vrot.lane.b32.xlu0 %v157, 127
        %v185 = vpop.permute.xlu0 %184
        %v189 = vsel %vm176, %v181, 0.0
        %v190 = vsel %vm176, %v183, 0.0
        %v191 = vsel %vm176, %v185, 0.0
        %vm192 = vcmp.le.s32.totalorder %v171, 14
        %193 = vrot.lane.b32.xlu0 %v155, 125
        %v194 = vpop.permute.xlu0 %193
        %195 = vrot.lane.b32.xlu0 %v156, 125
        %v196 = vpop.permute.xlu0 %195
        %197 = vrot.lane.b32.xlu0 %v157, 125
        %v198 = vpop.permute.xlu0 %197
        %v202 = vsel %vm192, %v194, 0.0
        %v203 = vsel %vm192, %v196, 0.0
        %v204 = vsel %vm192, %v198, 0.0
        %vm205 = vcmp.le.s32.totalorder %v171, 13
        %206 = vrot.lane.b32.xlu0 %v155, 124
        %v207 = vpop.permute.xlu0 %206
        %208 = vrot.lane.b32.xlu0 %v156, 124
        %v209 = vpop.permute.xlu0 %208
        %210 = vrot.lane.b32.xlu0 %v157, 124
        %v211 = vpop.permute.xlu0 %210
        %v215 = vsel %vm205, %v207, 0.0
        %v216 = vsel %vm205, %v209, 0.0
        %v217 = vsel %vm205, %v211, 0.0
        %v218 = vadd.f32 %v173, %v215
        %v219 = vadd.f32 %v174, %v216
        %v220 = vadd.f32 %v175, %v217
        %v221 = vadd.f32 %v189, %v202
        %v222 = vadd.f32 %v190, %v203
        %v223 = vadd.f32 %v191, %v204
        %v224 = vmul.f32 %v221, 2.0
        %v225 = vmul.f32 %v222, 2.0
        %v226 = vmul.f32 %v223, 2.0
        %v227 = vsub.f32 %v224, %v218
        %v228 = vsub.f32 %v225, %v219
        %v229 = vsub.f32 %v226, %v220
        %v230 = vmul.f32 %v155, 2.0
        %v231 = vmul.f32 %v156, 2.0
        %v232 = vmul.f32 %v157, 2.0
        %236 = vrot.lane.b32.xlu0 %v230, 126
        %v237 = vpop.permute.xlu0 %236
        %238 = vrot.lane.b32.xlu0 %v231, 126
        %v239 = vpop.permute.xlu0 %238
        %240 = vrot.lane.b32.xlu0 %v232, 126
        %v241 = vpop.permute.xlu0 %240
        %v245 = vsub.f32 %v227, %v237
        %v246 = vsub.f32 %v228, %v239
        %v247 = vsub.f32 %v229, %v241
        %v248 = vmul.f32 %v218, 2.0
        %v249 = vmul.f32 %v219, 2.0
        %v250 = vmul.f32 %v220, 2.0
        %v251 = vmul.f32 %v221, 6.0
        %v252 = vmul.f32 %v222, 6.0
        %v253 = vmul.f32 %v223, 6.0
        %v254 = vsub.f32 %v248, %v251
        %v255 = vsub.f32 %v249, %v252
        %v256 = vsub.f32 %v250, %v253
        %v257 = vmul.f32 %v155, 8.0
        %v258 = vmul.f32 %v156, 8.0
        %v259 = vmul.f32 %v157, 8.0
        %263 = vrot.lane.b32.xlu0 %v257, 126
        %v264 = vpop.permute.xlu0 %263
        %265 = vrot.lane.b32.xlu0 %v258, 126
        %v266 = vpop.permute.xlu0 %265
        %267 = vrot.lane.b32.xlu0 %v259, 126
        %v268 = vpop.permute.xlu0 %267
        %v272 = vadd.f32 %v254, %v264
        %v273 = vadd.f32 %v255, %v266
        %v274 = vadd.f32 %v256, %v268
        %v275 = vmul.f32 %v245, 2.0
        %v276 = vmul.f32 %v246, 2.0
        %v277 = vmul.f32 %v247, 2.0
        %vm281 = vcmask 1045504
        %v282 = vrot.slane %v275, 2
        %v283 = vrot.slane %v276, 2
        %v284 = vsel %vm281, %v282, %v283
        %v285 = vrot.slane %v277, 2
        %v286 = vsel %vm281, %v283, %v285
        %v289 = vsub.f32 %v245, %v284
        %v290 = vsub.f32 %v246, %v286
        %vm294 = vcmask 1043456
        %v295 = vrot.slane %v245, 4
        %v296 = vrot.slane %v246, 4
        %v297 = vsel %vm294, %v295, %v296
        %v298 = vrot.slane %v247, 4
        %v299 = vsel %vm294, %v296, %v298
        %v302 = vadd.f32 %v289, %v297
        %v303 = vadd.f32 %v290, %v299
        %v304 = vmul.f32 %v272, 2.0
        %v305 = vmul.f32 %v273, 2.0
        %v306 = vmul.f32 %v274, 2.0
        %vm310 = vcmask 1046528
        %v311 = vrot.slane %v304, 1
        %v312 = vrot.slane %v305, 1
        %v313 = vsel %vm310, %v311, %v312
        %v314 = vrot.slane %v306, 1
        %v315 = vsel %vm310, %v312, %v314
        %v319 = vsub.f32 %v272, %v313
        %v320 = vsub.f32 %v273, %v315
        %v321 = vsub.f32 %v274, %v314
        %v325 = vrot.slane %v272, 2
        %v326 = vrot.slane %v273, 2
        %v327 = vsel %vm281, %v325, %v326
        %v328 = vrot.slane %v274, 2
        %v329 = vsel %vm281, %v326, %v328
        %v333 = vadd.f32 %v319, %v327
        %v334 = vadd.f32 %v320, %v329
        %v335 = vadd.f32 %v321, %v328
        %v339 = vrot.slane %v333, 1
        %v340 = vrot.slane %v334, 1
        %v341 = vsel %vm310, %v339, %v340
        %v342 = vrot.slane %v335, 1
        %v343 = vsel %vm310, %v340, %v342
        %v346 = vadd.f32 %v302, %v341
        %v347 = vadd.f32 %v303, %v343
        %v348 = vmul.f32 %v346, 0.083333336
        %v349 = vmul.f32 %v347, 0.083333336
        %vm350 = vcmask 392192
        %351 = vst.msk [vmem:[%s136] sm:$0xff] %vm350, %v348
        %352 = vst.msk [vmem:[%s136 + $0x8] sm:$0xff] %vm350, %v349
        %s353 = sand.u32 %s52, 1
        %s354 = scalar_lea.sflag [#allocation5], %s353
        %s355 = sand.u32 %s52, 1
        %s356 = smul.addr %s355, 16
        %s357 = scalar_lea.vmem [#allocation6], %s356
        // Predicated region
        $region29: #{tpu_custom_call.1} parent=23 // pred_check
          %p358 = pneg %p62
        $region30: #{tpu_custom_call.1} parent=23 // pred_check_branch
          %360 = sbr.rel (%p358) target = $region32
        $region31: #{tpu_custom_call.1} parent=23 // pred_region
          %362 = vsyncadd %s354, 0
          %s363 = smul.addr %s18, 2
          %s364 = smul.addr %s363, 8
          %s365 = scalar_lea.hbm %s1, %s364
          %s366 = sshll.u32 %s357, 4
          %s367 = int_to_ptr.vmem [resolvable:$true] %s366
          %s368 = sshll.u32 %s365, 4
          %s369 = int_to_ptr.hbm [resolvable:$true] %s368
          %374 = dma.vmem_to_hbm [thread:$0]  %s367, 256, %s369, %s354, 128, 128, 8
        $region32: #{tpu_custom_call.1} parent=23 // pred_fallthru
          _
      $region24: #{tpu_custom_call.1} parent=5 // pred_fallthru
        _
      %p375 = scmp.le.s32.totalorder 2, %s13
      // Predicated region
      $region33: #{tpu_custom_call.1} parent=5 // pred_check
        %p376 = pneg %p375
      $region34: #{tpu_custom_call.1} parent=5 // pred_check_branch
        %378 = sbr.rel (%p376) target = $region36
      $region35: #{tpu_custom_call.1} parent=5 // pred_region
        %s379 = ssub.s32 %s13, 2
        // Predicated region
        $region37: #{tpu_custom_call.1} parent=35 // pred_check
          %p380 = pneg %p68
        $region38: #{tpu_custom_call.1} parent=35 // pred_check_branch
          %382 = sbr.rel (%p380) target = $region40
        $region39: #{tpu_custom_call.1} parent=35 // pred_region
          %s383 = sand.u32 %s53, 1
          %s384 = scalar_lea.sflag [#allocation5], %s383
          %s385 = sand.u32 %s53, 1
          %s386 = smul.addr %s385, 16
          %s387 = scalar_lea.vmem [#allocation6], %s386
          %389 = dma.done %s384, 256
        $region40: #{tpu_custom_call.1} parent=35 // pred_fallthru
          _
      $region36: #{tpu_custom_call.1} parent=5 // pred_fallthru
        _
    $region6: #{tpu_custom_call.1} parent=1 // loop_footer
      %s17 = sadd.s32 1, %s13
    $region7: #{tpu_custom_call.1} parent=1 // loop_footer_branch
      %12 = sbr.rel target = $region3
    $region8: #{tpu_custom_call.1} parent=1 // loop_exit
      _
    %390 = vsyncpa [#allocation4], 1
    %s391 = scalar_lea.sflag [#allocation4], 1
    %392 = vsyncpa %s391, 1
    %393 = vsyncpa [#allocation5], 1
    %s394 = scalar_lea.sflag [#allocation5], 1
    %395 = vsyncpa %s394, 1

</llo_original>
